<compile_context>
chip_gen: v7x
topology: tpu7x:2x2x1
jax: 0.10.0
libtpu: 0.0.40
codegen_flags: <defaults>
</compile_context>

<pallas_src>
import jax
import jax.numpy as jnp
from jax.experimental import pallas as pl
from jax.experimental.pallas import tpu as pltpu


def _round_up(x, m):
    return ((x + m - 1) // m) * m


def _padded_row_bytes(dim, dtype):
    # A (tile_n, dim) VMEM block pads the lane (last) axis up to a multiple of
    # 128; this is the per-row byte cost that actually gates tile_n.
    return _round_up(dim, 128) * jnp.dtype(dtype).itemsize


def conditional_generator_forward(noise, condition, condition_dim,
                                  *, min_pallas_bytes=1 << 20):
    """ConditionalGenerator.forward up to (undefined) self.main.

    noise:     (N, noise_dim, 1, 1)  NCHW
    condition: (N, condition_dim)
    returns:   (N, noise_dim + condition_dim, 1, 1)  NCHW
    """
    N, noise_dim = noise.shape[0], noise.shape[1]
    assert noise.shape[2] == 1 and noise.shape[3] == 1
    assert condition.shape == (N, condition_dim)
    out_dim = noise_dim + condition_dim

    # torch.cat promotes to the common dtype; never silently downcast.
    out_dtype = jnp.result_type(noise.dtype, condition.dtype)

    # Glue: squeeze unit spatial dims (pure reshape, no data movement).
    noise2d = noise.reshape(N, noise_dim)
    cond2d = condition.reshape(N, condition_dim)

    payload = (N * noise_dim * jnp.dtype(noise.dtype).itemsize
               + N * condition_dim * jnp.dtype(condition.dtype).itemsize
               + N * out_dim * jnp.dtype(out_dtype).itemsize)

    # Early-out: for tiny batches the fixed custom-call + pipeline prologue
    # overhead dwarfs the copy; let XLA fuse the concat + reshape.
    if payload < min_pallas_bytes:
        out2d = jnp.concatenate(
            [noise2d.astype(out_dtype), cond2d.astype(out_dtype)], axis=-1)
        return out2d.reshape(N, out_dim, 1, 1)

    # ---- tile-size selection (lane-padded, double-buffered footprint) ----
    per_row_bytes = (_padded_row_bytes(noise_dim, noise.dtype)
                     + _padded_row_bytes(condition_dim, condition.dtype)
                     + _padded_row_bytes(out_dim, out_dtype))
    VMEM_BLOCK_BUDGET = 24 << 20            # leaves headroom under the 32 MiB limit below
    max_rows_by_vmem = max(8, VMEM_BLOCK_BUDGET // (2 * per_row_bytes))
    tile_cap = min(8192, (max_rows_by_vmem // 8) * 8)
    # Keep >= ~4 grid steps so v7x's two TensorCores both get work.
    tile_n = max(8, min(tile_cap, _round_up(pl.cdiv(N, 4), 8)))
    if tile_n >= N:
        tile_n = N                           # block == full array dims is always legal
    grid = (pl.cdiv(N, tile_n),)

    def concat_kernel(n_ref, c_ref, o_ref):
        # In-kernel dtype cast is a free VPU op hidden under the DMAs.
        o_ref[...] = jnp.concatenate(
            [n_ref[...].astype(o_ref.dtype), c_ref[...].astype(o_ref.dtype)],
            axis=-1)

    cost = pl.CostEstimate(flops=0, transcendentals=0, bytes_accessed=payload)

    out2d = pl.pallas_call(
        concat_kernel,
        out_shape=jax.ShapeDtypeStruct((N, out_dim), out_dtype),
        grid=grid,
        in_specs=[
            pl.BlockSpec((tile_n, noise_dim), lambda i: (i, 0)),
            pl.BlockSpec((tile_n, condition_dim), lambda i: (i, 0)),
        ],
        out_specs=pl.BlockSpec((tile_n, out_dim), lambda i: (i, 0)),
        compiler_params=pltpu.CompilerParams(
            # Batch axis is embarrassingly parallel -> v7x's two TCs split it.
            dimension_semantics=("parallel",),
            # Raise v5e's 16 MiB scoped default so the large tile fits everywhere
            # (physical VMEM is 128/128/64 MiB on v5e/v6e/v7x).
            vmem_limit_bytes=32 << 20,
        ),
        cost_estimate=cost,
    )(noise2d, cond2d)

    # Glue: restore NCHW with unit spatial dims.
    return out2d.reshape(N, out_dim, 1, 1)


if __name__ == "__main__":
    noise_dim = 32
    condition_dim = 16

    key = jax.random.PRNGKey(0)
    k_noise, k_cond = jax.random.split(key)

    def ref_forward(noise, condition):
        out_dtype = jnp.result_type(noise.dtype, condition.dtype)
        return jnp.concatenate(
            [noise.astype(out_dtype),
             condition.reshape(-1, condition_dim, 1, 1).astype(out_dtype)],
            axis=1)

    # 1) Small example (batch=2) through the Pallas kernel (force past the
    #    tiny-payload fallback to exercise the kernel itself).
    batch = 2
    noise = jax.random.normal(k_noise, (batch, noise_dim, 1, 1), dtype=jnp.float32)
    condition = jax.random.normal(k_cond, (batch, condition_dim), dtype=jnp.float32)
    out = conditional_generator_forward(noise, condition, condition_dim,
                                        min_pallas_bytes=0)
    out = jax.block_until_ready(out)
    assert out.shape == (batch, noise_dim + condition_dim, 1, 1)
    assert jnp.allclose(out, ref_forward(noise, condition)), "Pallas mismatch (small batch)"

    # 2) Same small example through the default path (tiny-payload XLA fallback).
    out_fb = jax.block_until_ready(
        conditional_generator_forward(noise, condition, condition_dim))
    assert jnp.allclose(out_fb, ref_forward(noise, condition)), "fallback mismatch"

    # 3) Larger batch exercising the multi-step grid (4 parallel grid steps).
    batch_l = 1024
    noise_l = jax.random.normal(k_noise, (batch_l, noise_dim, 1, 1), dtype=jnp.float32)
    cond_l = jax.random.normal(k_cond, (batch_l, condition_dim), dtype=jnp.float32)
    out_l = jax.block_until_ready(
        conditional_generator_forward(noise_l, cond_l, condition_dim,
                                      min_pallas_bytes=0))
    assert out_l.shape == (batch_l, noise_dim + condition_dim, 1, 1)
    assert jnp.allclose(out_l, ref_forward(noise_l, cond_l)), "Pallas mismatch (large batch)"

    print("KERNEL_OK")
</pallas_src>

<mosaic_0001>
module attributes {stable_mosaic.version = 11 : i64} {
  func.func @concat_kernel(%arg0: i32, %arg1: memref<2x32xf32, #tpu.memory_space<vmem>>, %arg2: memref<2x16xf32, #tpu.memory_space<vmem>>, %arg3: memref<2x48xf32, #tpu.memory_space<vmem>>) attributes {dimension_semantics = [#tpu.dimension_semantics<parallel>], iteration_bounds = array<i64: 1>, scalar_prefetch = 0 : i64, scratch_operands = 0 : i64, tpu.core_type = #tpu.core_type<tc>, window_params = [{transform_indices = @transform_0, window_bounds = array<i64: 2, 32>}, {transform_indices = @transform_1, window_bounds = array<i64: 2, 16>}, {transform_indices = @transform_2, window_bounds = array<i64: 2, 48>}]} {
    %c0 = arith.constant 0 : index
    %c0_0 = arith.constant 0 : index
    %0 = vector.load %arg1[%c0, %c0_0] : memref<2x32xf32, #tpu.memory_space<vmem>>, vector<2x32xf32>
    %c0_1 = arith.constant 0 : index
    %c0_2 = arith.constant 0 : index
    %1 = vector.load %arg2[%c0_1, %c0_2] : memref<2x16xf32, #tpu.memory_space<vmem>>, vector<2x16xf32>
    %2 = tpu.concatenate %0, %1 in 1 : vector<2x32xf32>, vector<2x16xf32> -> vector<2x48xf32>
    %c0_3 = arith.constant 0 : index
    %c0_4 = arith.constant 0 : index
    %3 = vector.load %arg3[%c0_3, %c0_4] : memref<2x48xf32, #tpu.memory_space<vmem>>, vector<2x48xf32>
    tpu.vector_store %arg3[%c0_3, %c0_4], %2 {strides = array<i32>} : memref<2x48xf32, #tpu.memory_space<vmem>>, vector<2x48xf32>,
    return
  }
  func.func @transform_0(%arg0: i32) -> (i32, i32) {
    %c0_i32 = arith.constant 0 : i32
    %c0_i32_0 = arith.constant 0 : i32
    return %arg0, %c0_i32 : i32, i32
  }
  func.func @transform_1(%arg0: i32) -> (i32, i32) {
    %c0_i32 = arith.constant 0 : i32
    %c0_i32_0 = arith.constant 0 : i32
    return %arg0, %c0_i32 : i32, i32
  }
  func.func @transform_2(%arg0: i32) -> (i32, i32) {
    %c0_i32 = arith.constant 0 : i32
    %c0_i32_0 = arith.constant 0 : i32
    return %arg0, %c0_i32 : i32, i32
  }
}

</mosaic_0001>

<llo_original>
// kernel: tpu_custom_call.1
$region0: #{tpu_custom_call.1}
  #allocation0 [shape = 'u32[]', space=smem, size = 0x4, offset = 0x4, fixed_abs, tag = 'smem constant byte address 0x4 - core index']
  #allocation1 [shape = 'u32[144,128]{1,0:T(1,128)}', space=vmem, size = 0x12000, scoped, tag = 'internal scratch']
  %s0 = inlined_call_operand.hbm [shape: f32[2,32], index: 0, kind: input, shape index: {}]
  %s1 = inlined_call_operand.vmem [shape: f32[2,16], index: 1, kind: input, shape index: {}]
  %s2 = inlined_call_operand.hbm [shape: f32[2,48], index: 2, kind: output, shape index: {}]
  %s3 = sld [smem:[#allocation0]]
  $region22: #{tpu_custom_call.1} parent=0
    _
  %s5 = ssub.s32 1, %s3
  %s6 = scalar_select 0, %s5, %s3
  $region1: #{tpu_custom_call.1} parent=0
    #allocation2 [shape = 'u8[1024]{0}', space=vmem, size = 0x400, scoped, tag = 'input window, operand 0, single buffered']
    #allocation3 [shape = 's32[1]{0}', space=sflag, size = 0x4, scoped, tag = 'scoped memory for tpu_custom_call.1']
    #allocation4 [shape = 's32[1]{0}', space=sflag, size = 0x4, scoped, tag = 'scoped memory for tpu_custom_call.1']
    #allocation5 [shape = 'u8[1024]{0}', space=vmem, size = 0x400, scoped, tag = 'output window, operand 0, single buffered']
    %7 = vsyncpa [#allocation3], 0
    %8 = vsyncpa [#allocation4], 0
    // Predicated region
    $region2: #{tpu_custom_call.1} parent=1 // pred_check
      _
    $region3: #{tpu_custom_call.1} parent=1 // pred_check_branch
      %10 = sbr.rel (0) target = $region5
    $region4: #{tpu_custom_call.1} parent=1 // pred_region
      %s12 = ssub.s32 32, 32
      %13 = vsyncadd [#allocation3], %s12
      %s15 = sshll.u32 [#allocation2], 4
      %s16 = int_to_ptr.vmem [resolvable:$true] %s15
      %18 = dma.hbm_to_vmem [thread:$0]  %s0, 32, %s16, [#allocation3]
    $region5: #{tpu_custom_call.1} parent=1 // pred_fallthru
      _
    // Predicated region
    $region6: #{tpu_custom_call.1} parent=1 // pred_check
      _
    $region7: #{tpu_custom_call.1} parent=1 // pred_check_branch
      %20 = sbr.rel (0) target = $region9
    $region8: #{tpu_custom_call.1} parent=1 // pred_region
      _
    $region9: #{tpu_custom_call.1} parent=1 // pred_fallthru
      _
    // Predicated region
    $region10: #{tpu_custom_call.1} parent=1 // pred_check
      _
    $region11: #{tpu_custom_call.1} parent=1 // pred_check_branch
      %22 = sbr.rel (0) target = $region13
    $region12: #{tpu_custom_call.1} parent=1 // pred_region
      %23 = dma.done [#allocation3], 32
    $region13: #{tpu_custom_call.1} parent=1 // pred_fallthru
      _
    %v24 = vld [vmem:[#allocation2] sm:$0x3]
    %v25 = vld [vmem:[%s1] sm:$0x3]
    %27 = vrot.lane.b32.xlu0 %v25, 32
    %v28 = vpop.permute.xlu0 %27
    %vm30 = vcmask 261120
    %v31 = vsel %vm30, %v24, %v28
    %vm32 = vcmask 386048
    %33 = vst.msk [vmem:[#allocation5] sm:$0x3] %vm32, %v31
    // Predicated region
    $region14: #{tpu_custom_call.1} parent=1 // pred_check
      _
    $region15: #{tpu_custom_call.1} parent=1 // pred_check_branch
      %35 = sbr.rel (0) target = $region17
    $region16: #{tpu_custom_call.1} parent=1 // pred_region
      %s37 = ssub.s32 32, 32
      %38 = vsyncadd [#allocation4], %s37
      %s40 = sshll.u32 [#allocation5], 4
      %s41 = int_to_ptr.vmem [resolvable:$true] %s40
      %43 = dma.vmem_to_hbm [thread:$0]  %s41, 32, %s2, [#allocation4]
    $region17: #{tpu_custom_call.1} parent=1 // pred_fallthru
      _
    // Predicated region
    $region18: #{tpu_custom_call.1} parent=1 // pred_check
      _
    $region19: #{tpu_custom_call.1} parent=1 // pred_check_branch
      %45 = sbr.rel (0) target = $region21
    $region20: #{tpu_custom_call.1} parent=1 // pred_region
      %46 = dma.done [#allocation4], 32
    $region21: #{tpu_custom_call.1} parent=1 // pred_fallthru
      _
    %47 = vsyncpa [#allocation3], 1
    %48 = vsyncpa [#allocation4], 1

</llo_original>
